<compile_context>
chip_gen: v6e
topology: v6e:2x2x1
jax: 0.10.0
libtpu: 0.0.40
codegen_flags: <defaults>
</compile_context>

<pallas_src>
import jax
import jax.numpy as jnp
from jax.experimental import pallas as pl
from jax.experimental.pallas import tpu as pltpu


def _sum_axis1_int_kernel(x_ref, o_ref):
    # x_ref block: (Bt, C, th, tw) float32
    # o_ref block: (Bt, th, tw)    int32
    s = jnp.sum(x_ref[...], axis=1)         # VPU reduce over C (non-lane axis)
    o_ref[...] = s.astype(jnp.int32)        # trunc toward zero, like tensor.int()


def _input_tile_budget_bytes():
    # Per-generation input-tile budget: large enough to amortize per-step
    # overhead against HBM bandwidth, small enough that 2x double-buffered
    # input blocks + output blocks sit well under the scoped VMEM default
    # (16 MiB v5e, 32 MiB v6e/v7x; v7x has only 64 MiB physical).
    try:
        vmem = pltpu.get_tpu_info().vmem_capacity_bytes
    except Exception:
        vmem = 64 * 1024 * 1024
    if vmem >= 128 * 1024 * 1024:           # v5e / v6e
        return 8 * 1024 * 1024
    return 4 * 1024 * 1024                  # v7x / unknown


def _pick_tile(extent, align, max_elems):
    """Full extent if it fits, else the largest divisor of `extent` that is a
    multiple of `align` and <= max_elems. Falls back to the full extent
    (always a legal BlockSpec block)."""
    if extent <= max_elems:
        return extent
    t = (max_elems // align) * align
    while t >= align:
        if extent % t == 0:
            return t
        t -= align
    return extent


def add_model_forward(x):
    """Equivalent of AddModel.forward: x.sum(1).int() for a 4-D input."""
    B, C, H, W = x.shape
    itemsize = x.dtype.itemsize
    budget = _input_tile_budget_bytes()

    # Greedy tile sizing for the (Bt, C, th, tw) input block, full C always.
    # 1) W tile (lane axis): multiple of 128, kept as large as possible so
    #    output stores stay unmasked.
    max_tw = max(128, budget // (C * 8 * itemsize))
    tw = _pick_tile(W, 128, max_tw)
    # 2) H tile (sublane axis): multiple of 8.
    max_th = max(8, budget // (C * tw * itemsize))
    th = _pick_tile(H, 8, max_th)
    # 3) Batch grouping: pack as many batch elements per step as fit.
    max_bt = max(1, budget // (C * th * tw * itemsize))
    bt = _pick_tile(B, 1, max_bt)

    grid = (B // bt, H // th, W // tw)

    return pl.pallas_call(
        _sum_axis1_int_kernel,
        out_shape=jax.ShapeDtypeStruct((B, H, W), jnp.int32),
        grid_spec=pltpu.PrefetchScalarGridSpec(
            num_scalar_prefetch=0,
            grid=grid,
            in_specs=[pl.BlockSpec((bt, C, th, tw),
                                   lambda b, i, j: (b, 0, i, j))],
            out_specs=pl.BlockSpec((bt, th, tw),
                                   lambda b, i, j: (b, i, j)),
        ),
        compiler_params=pltpu.CompilerParams(
            dimension_semantics=("parallel", "parallel", "parallel"),
        ),
    )(x)


if __name__ == "__main__":
    key = jax.random.PRNGKey(0)
    # Small shapes consistent with the module: batch=2, channels=4, H=16,
    # W=128 (lane-aligned). The whole array fits one block -> grid (1,1,1).
    x = jax.random.normal(key, (2, 4, 16, 128), dtype=jnp.float32) * 5.0

    out = jax.block_until_ready(add_model_forward(x))

    # Reference check (pure JAX): sum over axis 1, truncate to int32.
    ref = jnp.sum(x, axis=1).astype(jnp.int32)
    assert out.shape == (2, 16, 128)
    assert out.dtype == jnp.int32
    assert bool(jnp.all(out == ref))

    print("KERNEL_OK")
</pallas_src>

<mosaic_0001>
module attributes {stable_mosaic.version = 11 : i64} {
  func.func @_sum_axis1_int_kernel(%arg0: i32, %arg1: i32, %arg2: i32, %arg3: memref<2x4x16x128xf32, #tpu.memory_space<vmem>>, %arg4: memref<2x16x128xi32, #tpu.memory_space<vmem>>) attributes {dimension_semantics = [#tpu.dimension_semantics<parallel>, #tpu.dimension_semantics<parallel>, #tpu.dimension_semantics<parallel>], iteration_bounds = array<i64: 1, 1, 1>, scalar_prefetch = 0 : i64, scratch_operands = 0 : i64, tpu.core_type = #tpu.core_type<tc>, window_params = [{transform_indices = @transform_0, window_bounds = array<i64: 2, 4, 16, 128>}, {transform_indices = @transform_1, window_bounds = array<i64: 2, 16, 128>}]} {
    %c0 = arith.constant 0 : index
    %c0_0 = arith.constant 0 : index
    %c0_1 = arith.constant 0 : index
    %c0_2 = arith.constant 0 : index
    %0 = vector.load %arg3[%c0, %c0_0, %c0_1, %c0_2] : memref<2x4x16x128xf32, #tpu.memory_space<vmem>>, vector<2x4x16x128xf32>
    %cst = arith.constant dense<0.000000e+00> : vector<2x16x128xf32>
    %1 = vector.multi_reduction <add>, %0, %cst [1] : vector<2x4x16x128xf32> to vector<2x16x128xf32>
    %2 = arith.fptosi %1 : vector<2x16x128xf32> to vector<2x16x128xi32>
    %c0_3 = arith.constant 0 : index
    %c0_4 = arith.constant 0 : index
    %c0_5 = arith.constant 0 : index
    %3 = vector.load %arg4[%c0_3, %c0_4, %c0_5] : memref<2x16x128xi32, #tpu.memory_space<vmem>>, vector<2x16x128xi32>
    tpu.vector_store %arg4[%c0_3, %c0_4, %c0_5], %2 {strides = array<i32>} : memref<2x16x128xi32, #tpu.memory_space<vmem>>, vector<2x16x128xi32>,
    return
  }
  func.func @transform_0(%arg0: i32, %arg1: i32, %arg2: i32) -> (i32, i32, i32, i32) {
    %c0_i32 = arith.constant 0 : i32
    %c0_i32_0 = arith.constant 0 : i32
    return %arg0, %c0_i32, %arg1, %arg2 : i32, i32, i32, i32
  }
  func.func @transform_1(%arg0: i32, %arg1: i32, %arg2: i32) -> (i32, i32, i32) {
    %c0_i32 = arith.constant 0 : i32
    return %arg0, %arg1, %arg2 : i32, i32, i32
  }
}

</mosaic_0001>

<llo_original>
// kernel: tpu_custom_call.1
$region0: #{tpu_custom_call.1}
  #allocation0 [shape = 'u32[]', space=smem, size = 0x4, offset = 0x4, fixed_abs, tag = 'smem constant byte address 0x4 - core index']
  #allocation1 [shape = 'u32[144,128]{1,0:T(1,128)}', space=vmem, size = 0x12000, scoped, tag = 'internal scratch']
  %s0 = inlined_call_operand.hbm [shape: f32[2,4,16,128], index: 0, kind: input, shape index: {}]
  %s1 = inlined_call_operand.hbm [shape: s32[2,16,128], index: 1, kind: output, shape index: {}]
  %s2 = sld [smem:[#allocation0]]
  $region18: #{tpu_custom_call.1} parent=0
    _
  %s4 = ssub.s32 1, %s2
  %s5 = scalar_select 0, %s4, %s2
  $region1: #{tpu_custom_call.1} parent=0
    #allocation2 [shape = 'u8[65536]{0}', space=vmem, size = 0x10000, scoped, tag = 'input window, operand 0, single buffered']
    #allocation3 [shape = 's32[1]{0}', space=sflag, size = 0x4, scoped, tag = 'scoped memory for tpu_custom_call.1']
    #allocation4 [shape = 's32[1]{0}', space=sflag, size = 0x4, scoped, tag = 'scoped memory for tpu_custom_call.1']
    #allocation5 [shape = 'u8[16384]{0}', space=vmem, size = 0x4000, scoped, tag = 'output window, operand 0, single buffered']
    %6 = vsyncpa [#allocation3], 0
    %7 = vsyncpa [#allocation4], 0
    // Predicated region
    $region2: #{tpu_custom_call.1} parent=1 // pred_check
      _
    $region3: #{tpu_custom_call.1} parent=1 // pred_check_branch
      %9 = sbr.rel (0) target = $region5
    $region4: #{tpu_custom_call.1} parent=1 // pred_region
      %s11 = ssub.s32 2048, 2048
      %12 = vsyncadd [#allocation3], %s11
      %s13 = sshll.u32 [#allocation2], 4
      %s14 = int_to_ptr.vmem [resolvable:$true] %s13
      %19 = dma.hbm_to_vmem [thread:$0]  %s0, 2048, %s14, [#allocation3], 128, 128, 8
    $region5: #{tpu_custom_call.1} parent=1 // pred_fallthru
      _
    // Predicated region
    $region6: #{tpu_custom_call.1} parent=1 // pred_check
      _
    $region7: #{tpu_custom_call.1} parent=1 // pred_check_branch
      %21 = sbr.rel (0) target = $region9
    $region8: #{tpu_custom_call.1} parent=1 // pred_region
      %22 = dma.done [#allocation3], 2048
    $region9: #{tpu_custom_call.1} parent=1 // pred_fallthru
      _
    %v23 = vld [vmem:[#allocation2] sm:$0xff]
    %v24 = vld [vmem:[#allocation2 + $0x8] sm:$0xff]
    %v25 = vld [vmem:[#allocation2 + $0x10] sm:$0xff]
    %v26 = vld [vmem:[#allocation2 + $0x18] sm:$0xff]
    %v27 = vld [vmem:[#allocation2 + $0x20] sm:$0xff]
    %v28 = vld [vmem:[#allocation2 + $0x28] sm:$0xff]
    %v29 = vld [vmem:[#allocation2 + $0x30] sm:$0xff]
    %v30 = vld [vmem:[#allocation2 + $0x38] sm:$0xff]
    %v31 = vld [vmem:[#allocation2 + $0x40] sm:$0xff]
    %v32 = vld [vmem:[#allocation2 + $0x48] sm:$0xff]
    %v33 = vld [vmem:[#allocation2 + $0x50] sm:$0xff]
    %v34 = vld [vmem:[#allocation2 + $0x58] sm:$0xff]
    %v35 = vld [vmem:[#allocation2 + $0x60] sm:$0xff]
    %v36 = vld [vmem:[#allocation2 + $0x68] sm:$0xff]
    %v37 = vld [vmem:[#allocation2 + $0x70] sm:$0xff]
    %v38 = vld [vmem:[#allocation2 + $0x78] sm:$0xff]
    %v39 = vadd.f32 %v23, %v25
    %v40 = vadd.f32 %v39, %v27
    %v41 = vadd.f32 %v40, %v29
    %v42 = vadd.f32 %v24, %v26
    %v43 = vadd.f32 %v42, %v28
    %v44 = vadd.f32 %v43, %v30
    %v45 = vadd.f32 %v31, %v33
    %v46 = vadd.f32 %v45, %v35
    %v47 = vadd.f32 %v46, %v37
    %v48 = vadd.f32 %v32, %v34
    %v49 = vadd.f32 %v48, %v36
    %v50 = vadd.f32 %v49, %v38
    %v51 = vcvt.f32.s32.to.zero.pseudo %v41
    %v52 = vcvt.f32.s32.to.zero.pseudo %v44
    %v53 = vcvt.f32.s32.to.zero.pseudo %v47
    %v54 = vcvt.f32.s32.to.zero.pseudo %v50
    %55 = vst [vmem:[#allocation5] sm:$0xff] %v51
    %56 = vst [vmem:[#allocation5 + $0x8] sm:$0xff] %v52
    %57 = vst [vmem:[#allocation5 + $0x10] sm:$0xff] %v53
    %58 = vst [vmem:[#allocation5 + $0x18] sm:$0xff] %v54
    // Predicated region
    $region10: #{tpu_custom_call.1} parent=1 // pred_check
      _
    $region11: #{tpu_custom_call.1} parent=1 // pred_check_branch
      %60 = sbr.rel (0) target = $region13
    $region12: #{tpu_custom_call.1} parent=1 // pred_region
      %s62 = ssub.s32 512, 512
      %63 = vsyncadd [#allocation4], %s62
      %s64 = sshll.u32 [#allocation5], 4
      %s65 = int_to_ptr.vmem [resolvable:$true] %s64
      %70 = dma.vmem_to_hbm [thread:$0]  %s65, 512, %s1, [#allocation4], 128, 128, 8
    $region13: #{tpu_custom_call.1} parent=1 // pred_fallthru
      _
    // Predicated region
    $region14: #{tpu_custom_call.1} parent=1 // pred_check
      _
    $region15: #{tpu_custom_call.1} parent=1 // pred_check_branch
      %72 = sbr.rel (0) target = $region17
    $region16: #{tpu_custom_call.1} parent=1 // pred_region
      %73 = dma.done [#allocation4], 512
    $region17: #{tpu_custom_call.1} parent=1 // pred_fallthru
      _
    %74 = vsyncpa [#allocation3], 1
    %75 = vsyncpa [#allocation4], 1

</llo_original>
